<compile_context>
chip_gen: v7x
topology: tpu7x:2x2x1
jax: 0.10.0
libtpu: 0.0.40
codegen_flags: <defaults>
</compile_context>

<pallas_src>
import functools

import jax
import jax.numpy as jnp
from jax import lax
from jax.experimental import pallas as pl
from jax.experimental.pallas import tpu as pltpu

BATCH = 2
SEQ = 8
DIM_FF = 128          # dim_ff (lane-aligned)
MAX_TILE_M = 256      # rows per grid step (cap)
ROW_CHUNK = 128       # in-kernel sub-chunk: bounds the f32 intermediate live range


# --------------------------------- kernel ------------------------------------
def ffn_kernel(x_ref, w1_ref, b1_ref, w2_ref, b2_ref, o_ref, *, row_chunk):
    # x_ref: (tile_m, D) f32 ; w1/w2: (D, D) bf16 ; b1/b2: (1, D) f32
    w1 = w1_ref[...]
    w2 = w2_ref[...]
    b1 = b1_ref[...]
    b2 = b2_ref[...]

    def rows(x_f32):
        x = x_f32.astype(jnp.bfloat16)                       # in-kernel cast (hidden under MXU)
        h = jnp.dot(x, w1, preferred_element_type=jnp.float32) + b1
        h = jnp.maximum(h, 0.0)                              # ReLU / bias math in f32 (v5e-safe)
        y = jnp.dot(h.astype(jnp.bfloat16), w2,
                    preferred_element_type=jnp.float32)
        return y + b2

    tile_m = x_ref.shape[0]
    if tile_m == row_chunk:                                  # static: single chunk
        o_ref[...] = rows(x_ref[...]).astype(o_ref.dtype)
    else:                                                    # static: chunked body
        def body(c, carry):
            r = pl.multiple_of(c * row_chunk, row_chunk)
            o_ref[pl.ds(r, row_chunk), :] = rows(
                x_ref[pl.ds(r, row_chunk), :]).astype(o_ref.dtype)
            return carry

        lax.fori_loop(0, tile_m // row_chunk, body, 0, unroll=True)


# ------------------------------ wrapper (glue) --------------------------------
def feed_forward_block(x, w1, b1, w2, b2, *, out_dtype=jnp.float32):
    """x: (..., D) float32.  w1/w2: (D, D) bf16, [in, out] layout (torch weight.T).
    b1/b2: (1, D) float32.  Returns out_dtype array with x's shape."""
    orig_shape = x.shape
    d = orig_shape[-1]
    x2 = x.reshape(-1, d)
    m = x2.shape[0]

    # One grid step for small inputs, else 256-row steps with 128-row sub-chunks.
    # No wrapper-side padding: the ragged last block is fine (rows independent).
    m_aligned = pl.cdiv(m, 8) * 8                            # sublane alignment
    tile_m = m_aligned if m_aligned <= MAX_TILE_M else MAX_TILE_M
    row_chunk = ROW_CHUNK if (tile_m > ROW_CHUNK and tile_m % ROW_CHUNK == 0) else tile_m
    grid_m = pl.cdiv(m, tile_m)

    out_itemsize = jnp.dtype(out_dtype).itemsize
    cost = pl.CostEstimate(
        flops=4 * m * d * d,                                 # two (m,d)x(d,d) matmuls
        transcendentals=0,
        bytes_accessed=(x2.size * x2.dtype.itemsize
                        + m * d * out_itemsize
                        + w1.size * w1.dtype.itemsize
                        + w2.size * w2.dtype.itemsize
                        + b1.size * b1.dtype.itemsize
                        + b2.size * b2.dtype.itemsize),
    )

    out = pl.pallas_call(
        functools.partial(ffn_kernel, row_chunk=row_chunk),
        out_shape=jax.ShapeDtypeStruct((m, d), out_dtype),
        grid=(grid_m,),
        in_specs=[
            pl.BlockSpec((tile_m, d), lambda i: (i, 0)),     # activations, tiled over rows
            pl.BlockSpec((d, d), lambda i: (0, 0)),          # w1 (grid-invariant, VMEM-resident)
            pl.BlockSpec((1, d), lambda i: (0, 0)),          # b1
            pl.BlockSpec((d, d), lambda i: (0, 0)),          # w2 (grid-invariant)
            pl.BlockSpec((1, d), lambda i: (0, 0)),          # b2
        ],
        out_specs=pl.BlockSpec((tile_m, d), lambda i: (i, 0)),
        compiler_params=pltpu.CompilerParams(
            dimension_semantics=("parallel",),               # rows independent -> megacore split
        ),
        cost_estimate=cost,
    )(x2, w1, b1, w2, b2)

    return out.reshape(orig_shape)


def init_params(key, dim_ff=DIM_FF):
    k1, k2, k3, k4 = jax.random.split(key, 4)
    scale = 1.0 / (dim_ff ** 0.5)
    # [in, out] layout == torch nn.Linear weight transposed
    w1 = jax.random.uniform(k1, (dim_ff, dim_ff), jnp.float32, -scale, scale).astype(jnp.bfloat16)
    w2 = jax.random.uniform(k2, (dim_ff, dim_ff), jnp.float32, -scale, scale).astype(jnp.bfloat16)
    b1 = jax.random.uniform(k3, (1, dim_ff), jnp.float32, -scale, scale)
    b2 = jax.random.uniform(k4, (1, dim_ff), jnp.float32, -scale, scale)
    return w1, b1, w2, b2


def _reference(x, w1, b1, w2, b2):
    # pure-JAX reference using the same bf16-rounded operands as the kernel
    xr = x.astype(jnp.bfloat16).astype(jnp.float32)
    h = jnp.maximum(xr @ w1.astype(jnp.float32) + b1, 0.0)
    return h.astype(jnp.bfloat16).astype(jnp.float32) @ w2.astype(jnp.float32) + b2


# ----------------------------------- main -------------------------------------
if __name__ == "__main__":
    key = jax.random.PRNGKey(0)
    kp, kx1, kx2 = jax.random.split(key, 3)
    w1, b1, w2, b2 = init_params(kp)

    # case 1: module-sized toy input (m=16 -> single grid step, grid=(1,))
    ffn_in = jax.random.normal(kx1, (BATCH, SEQ, DIM_FF), jnp.float32)
    out = jax.block_until_ready(feed_forward_block(ffn_in, w1, b1, w2, b2))
    assert out.shape == (BATCH, SEQ, DIM_FF)
    assert bool(jnp.all(jnp.isfinite(out)))
    ref = _reference(ffn_in, w1, b1, w2, b2)
    err = float(jnp.max(jnp.abs(out - ref)))
    assert err < 5e-2, f"case1 max abs error {err}"

    # case 2: larger input exercising 256-row tiles, 128-row sub-chunks and a
    #         ragged last grid block (m=600 -> grid=(3,))
    x_big = jax.random.normal(kx2, (600, DIM_FF), jnp.float32)
    out_big = jax.block_until_ready(feed_forward_block(x_big, w1, b1, w2, b2))
    ref_big = _reference(x_big, w1, b1, w2, b2)
    err_big = float(jnp.max(jnp.abs(out_big - ref_big)))
    assert out_big.shape == (600, DIM_FF)
    assert err_big < 5e-2, f"case2 max abs error {err_big}"

    print("KERNEL_OK")
</pallas_src>

<mosaic_0001>
module attributes {stable_mosaic.version = 11 : i64} {
  func.func @ffn_kernel(%arg0: i32, %arg1: memref<16x128xf32, #tpu.memory_space<vmem>>, %arg2: memref<128x128xbf16, #tpu.memory_space<vmem>>, %arg3: memref<1x128xf32, #tpu.memory_space<vmem>>, %arg4: memref<128x128xbf16, #tpu.memory_space<vmem>>, %arg5: memref<1x128xf32, #tpu.memory_space<vmem>>, %arg6: memref<16x128xf32, #tpu.memory_space<vmem>>) attributes {dimension_semantics = [#tpu.dimension_semantics<parallel>], iteration_bounds = array<i64: 1>, scalar_prefetch = 0 : i64, scratch_operands = 0 : i64, tpu.core_type = #tpu.core_type<tc>, window_params = [{transform_indices = @transform_0, window_bounds = array<i64: 16, 128>}, {pipeline_mode = #tpu.pipeline_mode<synchronous>, transform_indices = @transform_1, window_bounds = array<i64: 128, 128>}, {pipeline_mode = #tpu.pipeline_mode<synchronous>, transform_indices = @transform_2, window_bounds = array<i64: 1, 128>}, {pipeline_mode = #tpu.pipeline_mode<synchronous>, transform_indices = @transform_3, window_bounds = array<i64: 128, 128>}, {pipeline_mode = #tpu.pipeline_mode<synchronous>, transform_indices = @transform_4, window_bounds = array<i64: 1, 128>}, {transform_indices = @transform_5, window_bounds = array<i64: 16, 128>}]} {
    %c0 = arith.constant 0 : index
    %c0_0 = arith.constant 0 : index
    %0 = vector.load %arg2[%c0, %c0_0] : memref<128x128xbf16, #tpu.memory_space<vmem>>, vector<128x128xbf16>
    %c0_1 = arith.constant 0 : index
    %c0_2 = arith.constant 0 : index
    %1 = vector.load %arg4[%c0_1, %c0_2] : memref<128x128xbf16, #tpu.memory_space<vmem>>, vector<128x128xbf16>
    %c0_3 = arith.constant 0 : index
    %c0_4 = arith.constant 0 : index
    %2 = vector.load %arg3[%c0_3, %c0_4] : memref<1x128xf32, #tpu.memory_space<vmem>>, vector<1x128xf32>
    %c0_5 = arith.constant 0 : index
    %c0_6 = arith.constant 0 : index
    %3 = vector.load %arg5[%c0_5, %c0_6] : memref<1x128xf32, #tpu.memory_space<vmem>>, vector<1x128xf32>
    %c0_7 = arith.constant 0 : index
    %c0_8 = arith.constant 0 : index
    %4 = vector.load %arg1[%c0_7, %c0_8] : memref<16x128xf32, #tpu.memory_space<vmem>>, vector<16x128xf32>
    %5 = arith.truncf %4 : vector<16x128xf32> to vector<16x128xbf16>
    %cst = arith.constant dense<0.000000e+00> : vector<16x128xf32>
    %6 = tpu.matmul %5, %0, %cst {dimension_numbers = #tpu.dot_dimension_numbers<[1], [0], [0], [1], [0, 0, 1, 1], [], []>} : vector<16x128xbf16>, vector<128x128xbf16>, vector<16x128xf32> -> vector<16x128xf32>
    %7 = vector.broadcast %2 : vector<1x128xf32> to vector<16x128xf32>
    %8 = arith.addf %6, %7 : vector<16x128xf32>
    %cst_9 = arith.constant 0.000000e+00 : f32
    %9 = vector.broadcast %cst_9 : f32 to vector<16x128xf32>
    %10 = arith.maximumf %8, %9 : vector<16x128xf32>
    %11 = arith.truncf %10 : vector<16x128xf32> to vector<16x128xbf16>
    %cst_10 = arith.constant dense<0.000000e+00> : vector<16x128xf32>
    %12 = tpu.matmul %11, %1, %cst_10 {dimension_numbers = #tpu.dot_dimension_numbers<[1], [0], [0], [1], [0, 0, 1, 1], [], []>} : vector<16x128xbf16>, vector<128x128xbf16>, vector<16x128xf32> -> vector<16x128xf32>
    %13 = vector.broadcast %3 : vector<1x128xf32> to vector<16x128xf32>
    %14 = arith.addf %12, %13 : vector<16x128xf32>
    %c0_11 = arith.constant 0 : index
    %c0_12 = arith.constant 0 : index
    %15 = vector.load %arg6[%c0_11, %c0_12] : memref<16x128xf32, #tpu.memory_space<vmem>>, vector<16x128xf32>
    tpu.vector_store %arg6[%c0_11, %c0_12], %14 {strides = array<i32>} : memref<16x128xf32, #tpu.memory_space<vmem>>, vector<16x128xf32>,
    return
  }
  func.func @transform_0(%arg0: i32) -> (i32, i32) {
    %c0_i32 = arith.constant 0 : i32
    %c0_i32_0 = arith.constant 0 : i32
    return %arg0, %c0_i32 : i32, i32
  }
  func.func @transform_1(%arg0: i32) -> (i32, i32) {
    %c0_i32 = arith.constant 0 : i32
    %c0_i32_0 = arith.constant 0 : i32
    %c0_i32_1 = arith.constant 0 : i32
    return %c0_i32, %c0_i32_0 : i32, i32
  }
  func.func @transform_2(%arg0: i32) -> (i32, i32) {
    %c0_i32 = arith.constant 0 : i32
    %c0_i32_0 = arith.constant 0 : i32
    %c0_i32_1 = arith.constant 0 : i32
    return %c0_i32, %c0_i32_0 : i32, i32
  }
  func.func @transform_3(%arg0: i32) -> (i32, i32) {
    %c0_i32 = arith.constant 0 : i32
    %c0_i32_0 = arith.constant 0 : i32
    %c0_i32_1 = arith.constant 0 : i32
    return %c0_i32, %c0_i32_0 : i32, i32
  }
  func.func @transform_4(%arg0: i32) -> (i32, i32) {
    %c0_i32 = arith.constant 0 : i32
    %c0_i32_0 = arith.constant 0 : i32
    %c0_i32_1 = arith.constant 0 : i32
    return %c0_i32, %c0_i32_0 : i32, i32
  }
  func.func @transform_5(%arg0: i32) -> (i32, i32) {
    %c0_i32 = arith.constant 0 : i32
    %c0_i32_0 = arith.constant 0 : i32
    return %arg0, %c0_i32 : i32, i32
  }
}

</mosaic_0001>

<llo_original>
// kernel: tpu_custom_call.1
$region0: #{tpu_custom_call.1}
  #allocation0 [shape = 'u32[]', space=smem, size = 0x4, offset = 0x4, fixed_abs, tag = 'smem constant byte address 0x4 - core index']
  #allocation1 [shape = 'u32[144,128]{1,0:T(1,128)}', space=vmem, size = 0x12000, scoped, tag = 'internal scratch']
  %s0 = inlined_call_operand.hbm [shape: f32[16,128], index: 0, kind: input, shape index: {}]
  %s1 = inlined_call_operand.hbm [shape: bf16[128,128], index: 1, kind: input, shape index: {}]
  %s2 = inlined_call_operand.vmem [shape: f32[1,128], index: 2, kind: input, shape index: {}]
  %s3 = inlined_call_operand.hbm [shape: bf16[128,128], index: 3, kind: input, shape index: {}]
  %s4 = inlined_call_operand.vmem [shape: f32[1,128], index: 4, kind: input, shape index: {}]
  %s5 = inlined_call_operand.hbm [shape: f32[16,128], index: 5, kind: output, shape index: {}]
  %s6 = sld [smem:[#allocation0]]
  $region42: #{tpu_custom_call.1} parent=0
    _
  %s8 = ssub.s32 1, %s6
  %s9 = scalar_select 0, %s8, %s6
  $region1: #{tpu_custom_call.1} parent=0
    #allocation2 [shape = 'u8[8192]{0}', space=vmem, size = 0x2000, scoped, tag = 'input window, operand 0, single buffered']
    #allocation3 [shape = 's32[1]{0}', space=sflag, size = 0x4, scoped, tag = 'scoped memory for tpu_custom_call.1']
    #allocation4 [shape = 's32[1]{0}', space=sflag, size = 0x4, scoped, tag = 'scoped memory for tpu_custom_call.1']
    #allocation5 [shape = 'u8[32768]{0}', space=vmem, size = 0x8000, scoped, tag = 'input window, operand 1, single buffered']
    #allocation6 [shape = 's32[1]{0}', space=sflag, size = 0x4, scoped, tag = 'scoped memory for tpu_custom_call.1']
    #allocation7 [shape = 'u8[32768]{0}', space=vmem, size = 0x8000, scoped, tag = 'input window, operand 3, single buffered']
    #allocation8 [shape = 'u8[8192]{0}', space=vmem, size = 0x2000, scoped, tag = 'output window, operand 0, single buffered']
    %10 = vsyncpa [#allocation3], 0
    %11 = vsyncpa [#allocation6], 0
    %12 = vsyncpa [#allocation4], 0
    // Predicated region
    $region2: #{tpu_custom_call.1} parent=1 // pred_check
      _
    $region3: #{tpu_custom_call.1} parent=1 // pred_check_branch
      %14 = sbr.rel (0) target = $region5
    $region4: #{tpu_custom_call.1} parent=1 // pred_region
      %s16 = ssub.s32 256, 256
      %17 = vsyncadd [#allocation3], %s16
      %s18 = sshll.u32 [#allocation2], 4
      %s19 = int_to_ptr.vmem [resolvable:$true] %s18
      %24 = dma.hbm_to_vmem [thread:$0]  %s0, 256, %s19, [#allocation3], 128, 128, 8
    $region5: #{tpu_custom_call.1} parent=1 // pred_fallthru
      _
    // Predicated region
    $region6: #{tpu_custom_call.1} parent=1 // pred_check
      _
    $region7: #{tpu_custom_call.1} parent=1 // pred_check_branch
      %26 = sbr.rel (0) target = $region9
    $region8: #{tpu_custom_call.1} parent=1 // pred_region
      %s28 = ssub.s32 1024, 1024
      %29 = vsyncadd [#allocation6], %s28
      %s30 = sshll.u32 [#allocation5], 4
      %s31 = int_to_ptr.vmem [resolvable:$true] %s30
      %36 = dma.hbm_to_vmem [thread:$0]  %s1, 1024, %s31, [#allocation6], 64, 64, 4
    $region9: #{tpu_custom_call.1} parent=1 // pred_fallthru
      _
    // Predicated region
    $region10: #{tpu_custom_call.1} parent=1 // pred_check
      _
    $region11: #{tpu_custom_call.1} parent=1 // pred_check_branch
      %38 = sbr.rel (0) target = $region13
    $region12: #{tpu_custom_call.1} parent=1 // pred_region
      _
    $region13: #{tpu_custom_call.1} parent=1 // pred_fallthru
      _
    // Predicated region
    $region14: #{tpu_custom_call.1} parent=1 // pred_check
      _
    $region15: #{tpu_custom_call.1} parent=1 // pred_check_branch
      %40 = sbr.rel (0) target = $region17
    $region16: #{tpu_custom_call.1} parent=1 // pred_region
      %s42 = ssub.s32 1024, 1024
      %43 = vsyncadd [#allocation6], %s42
      %s44 = sshll.u32 [#allocation7], 4
      %s45 = int_to_ptr.vmem [resolvable:$true] %s44
      %50 = dma.hbm_to_vmem [thread:$0]  %s3, 1024, %s45, [#allocation6], 64, 64, 4
    $region17: #{tpu_custom_call.1} parent=1 // pred_fallthru
      _
    // Predicated region
    $region18: #{tpu_custom_call.1} parent=1 // pred_check
      _
    $region19: #{tpu_custom_call.1} parent=1 // pred_check_branch
      %52 = sbr.rel (0) target = $region21
    $region20: #{tpu_custom_call.1} parent=1 // pred_region
      _
    $region21: #{tpu_custom_call.1} parent=1 // pred_fallthru
      _
    // Predicated region
    $region22: #{tpu_custom_call.1} parent=1 // pred_check
      _
    $region23: #{tpu_custom_call.1} parent=1 // pred_check_branch
      %54 = sbr.rel (0) target = $region25
    $region24: #{tpu_custom_call.1} parent=1 // pred_region
      %55 = dma.done [#allocation3], 256
    $region25: #{tpu_custom_call.1} parent=1 // pred_fallthru
      _
    // Predicated region
    $region26: #{tpu_custom_call.1} parent=1 // pred_check
      _
    $region27: #{tpu_custom_call.1} parent=1 // pred_check_branch
      %57 = sbr.rel (0) target = $region29
    $region28: #{tpu_custom_call.1} parent=1 // pred_region
      %58 = dma.done [#allocation6], 1024
    $region29: #{tpu_custom_call.1} parent=1 // pred_fallthru
      _
    // Predicated region
    $region30: #{tpu_custom_call.1} parent=1 // pred_check
      _
    $region31: #{tpu_custom_call.1} parent=1 // pred_check_branch
      %60 = sbr.rel (0) target = $region33
    $region32: #{tpu_custom_call.1} parent=1 // pred_region
      %61 = dma.done [#allocation6], 1024
    $region33: #{tpu_custom_call.1} parent=1 // pred_fallthru
      _
    %v63 = vld [vmem:[#allocation5] sm:$0xf]
    %v64 = vld [vmem:[#allocation5 + $0x4] sm:$0xf]
    %v65 = vld [vmem:[#allocation5 + $0x8] sm:$0xf]
    %v66 = vld [vmem:[#allocation5 + $0xc] sm:$0xf]
    %v67 = vld [vmem:[#allocation5 + $0x10] sm:$0xf]
    %v68 = vld [vmem:[#allocation5 + $0x14] sm:$0xf]
    %v69 = vld [vmem:[#allocation5 + $0x18] sm:$0xf]
    %v70 = vld [vmem:[#allocation5 + $0x1c] sm:$0xf]
    %v71 = vld [vmem:[#allocation5 + $0x20] sm:$0xf]
    %v72 = vld [vmem:[#allocation5 + $0x24] sm:$0xf]
    %v73 = vld [vmem:[#allocation5 + $0x28] sm:$0xf]
    %v74 = vld [vmem:[#allocation5 + $0x2c] sm:$0xf]
    %v75 = vld [vmem:[#allocation5 + $0x30] sm:$0xf]
    %v76 = vld [vmem:[#allocation5 + $0x34] sm:$0xf]
    %v77 = vld [vmem:[#allocation5 + $0x38] sm:$0xf]
    %v78 = vld [vmem:[#allocation5 + $0x3c] sm:$0xf]
    %v79 = vld [vmem:[#allocation7] sm:$0xf]
    %v80 = vld [vmem:[#allocation7 + $0x4] sm:$0xf]
    %v81 = vld [vmem:[#allocation7 + $0x8] sm:$0xf]
    %v82 = vld [vmem:[#allocation7 + $0xc] sm:$0xf]
    %v83 = vld [vmem:[#allocation7 + $0x10] sm:$0xf]
    %v84 = vld [vmem:[#allocation7 + $0x14] sm:$0xf]
    %v85 = vld [vmem:[#allocation7 + $0x18] sm:$0xf]
    %v86 = vld [vmem:[#allocation7 + $0x1c] sm:$0xf]
    %v87 = vld [vmem:[#allocation7 + $0x20] sm:$0xf]
    %v88 = vld [vmem:[#allocation7 + $0x24] sm:$0xf]
    %v89 = vld [vmem:[#allocation7 + $0x28] sm:$0xf]
    %v90 = vld [vmem:[#allocation7 + $0x2c] sm:$0xf]
    %v91 = vld [vmem:[#allocation7 + $0x30] sm:$0xf]
    %v92 = vld [vmem:[#allocation7 + $0x34] sm:$0xf]
    %v93 = vld [vmem:[#allocation7 + $0x38] sm:$0xf]
    %v94 = vld [vmem:[#allocation7 + $0x3c] sm:$0xf]
    %v95 = vld [vmem:[%s2] sm:$0x1]
    %v96 = vld [vmem:[%s4] sm:$0x1]
    %v97 = vld [vmem:[#allocation2] sm:$0xff]
    %v98 = vld [vmem:[#allocation2 + $0x8] sm:$0xff]
    %v99 = vpack.c.bf16 %v98, %v97
    %v101 = vlaneseq
    %v102 = vshrl.u32 %v101, 7
    %v103 = vsub.s32 0, %v102
    %v104 = vrot.slane %v95, %v103
    %v122 = vunpack.c.l.b16 %v63
    %v123 = vunpack.c.l.b16 %v64
    %v124 = vunpack.c.l.b16 %v65
    %v125 = vunpack.c.l.b16 %v66
    %v126 = vunpack.c.l.b16 %v67
    %v127 = vunpack.c.l.b16 %v68
    %v128 = vunpack.c.l.b16 %v69
    %v129 = vunpack.c.l.b16 %v70
    %v130 = vunpack.c.l.b16 %v71
    %v131 = vunpack.c.l.b16 %v72
    %v132 = vunpack.c.l.b16 %v73
    %v133 = vunpack.c.l.b16 %v74
    %v134 = vunpack.c.l.b16 %v75
    %v135 = vunpack.c.l.b16 %v76
    %v136 = vunpack.c.l.b16 %v77
    %v137 = vunpack.c.l.b16 %v78
    %v138 = vpack.c.b16 %v123, %v122
    %v139 = vpack.c.b16 %v125, %v124
    %v140 = vpack.c.b16 %v127, %v126
    %v141 = vpack.c.b16 %v129, %v128
    %v142 = vpack.c.b16 %v131, %v130
    %v143 = vpack.c.b16 %v133, %v132
    %v144 = vpack.c.b16 %v135, %v134
    %v145 = vpack.c.b16 %v137, %v136
    %154 = vmatprep.subr.bf16.mxu0 0
    %155 = vmatpush1.bf16.msra.mxu0 %v138
    %156 = vmatprep.subr.bf16.mxu0 0
    %157 = vmatpush1.bf16.msra.mxu0 %v139
    %158 = vmatprep.subr.bf16.mxu0 0
    %159 = vmatpush1.bf16.msra.mxu0 %v140
    %160 = vmatprep.subr.bf16.mxu0 0
    %161 = vmatpush1.bf16.msra.mxu0 %v141
    %162 = vmatprep.subr.bf16.mxu0 0
    %163 = vmatpush1.bf16.msra.mxu0 %v142
    %164 = vmatprep.subr.bf16.mxu0 0
    %165 = vmatpush1.bf16.msra.mxu0 %v143
    %166 = vmatprep.subr.bf16.mxu0 0
    %167 = vmatpush1.bf16.msra.mxu0 %v144
    %168 = vmatprep.subr.bf16.mxu0 0
    %169 = vmatpush1.bf16.msra.mxu0 %v145
    %170 = vmatprep.subr.bf16.mxu0 0
    %171 = vmatpush1.bf16.msra.mxu0 0
    %172 = vmatprep.subr.bf16.mxu0 0
    %173 = vmatpush1.bf16.msra.mxu0 0
    %174 = vmatprep.subr.bf16.mxu0 0
    %175 = vmatpush1.bf16.msra.mxu0 0
    %176 = vmatprep.subr.bf16.mxu0 0
    %177 = vmatpush1.bf16.msra.mxu0 0
    %178 = vmatprep.subr.bf16.mxu0 0
    %179 = vmatpush1.bf16.msra.mxu0 0
    %180 = vmatprep.subr.bf16.mxu0 0
    %181 = vmatpush1.bf16.msra.mxu0 0
    %182 = vmatprep.subr.bf16.mxu0 0
    %183 = vmatpush1.bf16.msra.mxu0 0
    %184 = vmatprep.subr.bf16.mxu0 0
    %185 = vmatpush1.bf16.msra.mxu0 0
    %186 = vmatprep.mubr.bf16.mxu0 0
    %187 = vmatmul.mubr.bf16.gmra.mrb[0].mxu0 %v99
    %v188 = vpop.f32.mrb[0].mxu0
    %v189 = vadd.f32 %v104, %v188
    %v190 = vpop.f32.mrb[0].mxu0
    %v191 = vpop.f32.mrb[0].mxu0
    %v192 = vadd.f32 %v104, %v191
    %v193 = vpop.f32.mrb[0].mxu0
    %194 = vdwg.mxu0
    %v195 = vmax.f32 %v189, 0.0
    %v196 = vmax.f32 %v192, 0.0
    %v197 = vpack.c.bf16 %v196, %v195
    %v199 = vlaneseq
    %v200 = vshrl.u32 %v199, 7
    %v201 = vsub.s32 0, %v200
    %v202 = vrot.slane %v96, %v201
    %v220 = vunpack.c.l.b16 %v79
    %v221 = vunpack.c.l.b16 %v80
    %v222 = vunpack.c.l.b16 %v81
    %v223 = vunpack.c.l.b16 %v82
    %v224 = vunpack.c.l.b16 %v83
    %v225 = vunpack.c.l.b16 %v84
    %v226 = vunpack.c.l.b16 %v85
    %v227 = vunpack.c.l.b16 %v86
    %v228 = vunpack.c.l.b16 %v87
    %v229 = vunpack.c.l.b16 %v88
    %v230 = vunpack.c.l.b16 %v89
    %v231 = vunpack.c.l.b16 %v90
    %v232 = vunpack.c.l.b16 %v91
    %v233 = vunpack.c.l.b16 %v92
    %v234 = vunpack.c.l.b16 %v93
    %v235 = vunpack.c.l.b16 %v94
    %v236 = vpack.c.b16 %v221, %v220
    %v237 = vpack.c.b16 %v223, %v222
    %v238 = vpack.c.b16 %v225, %v224
    %v239 = vpack.c.b16 %v227, %v226
    %v240 = vpack.c.b16 %v229, %v228
    %v241 = vpack.c.b16 %v231, %v230
    %v242 = vpack.c.b16 %v233, %v232
    %v243 = vpack.c.b16 %v235, %v234
    %252 = vmatprep.subr.bf16.mxu0 0
    %253 = vmatpush1.bf16.msra.mxu0 %v236
    %254 = vmatprep.subr.bf16.mxu0 0
    %255 = vmatpush1.bf16.msra.mxu0 %v237
    %256 = vmatprep.subr.bf16.mxu0 0
    %257 = vmatpush1.bf16.msra.mxu0 %v238
    %258 = vmatprep.subr.bf16.mxu0 0
    %259 = vmatpush1.bf16.msra.mxu0 %v239
    %260 = vmatprep.subr.bf16.mxu0 0
    %261 = vmatpush1.bf16.msra.mxu0 %v240
    %262 = vmatprep.subr.bf16.mxu0 0
    %263 = vmatpush1.bf16.msra.mxu0 %v241
    %264 = vmatprep.subr.bf16.mxu0 0
    %265 = vmatpush1.bf16.msra.mxu0 %v242
    %266 = vmatprep.subr.bf16.mxu0 0
    %267 = vmatpush1.bf16.msra.mxu0 %v243
    %268 = vmatprep.subr.bf16.mxu0 0
    %269 = vmatpush1.bf16.msra.mxu0 0
    %270 = vmatprep.subr.bf16.mxu0 0
    %271 = vmatpush1.bf16.msra.mxu0 0
    %272 = vmatprep.subr.bf16.mxu0 0
    %273 = vmatpush1.bf16.msra.mxu0 0
    %274 = vmatprep.subr.bf16.mxu0 0
    %275 = vmatpush1.bf16.msra.mxu0 0
    %276 = vmatprep.subr.bf16.mxu0 0
    %277 = vmatpush1.bf16.msra.mxu0 0
    %278 = vmatprep.subr.bf16.mxu0 0
    %279 = vmatpush1.bf16.msra.mxu0 0
    %280 = vmatprep.subr.bf16.mxu0 0
    %281 = vmatpush1.bf16.msra.mxu0 0
    %282 = vmatprep.subr.bf16.mxu0 0
    %283 = vmatpush1.bf16.msra.mxu0 0
    %284 = vmatprep.mubr.bf16.mxu0 0
    %285 = vmatmul.mubr.bf16.gmra.mrb[0].mxu0 %v197
    %v286 = vpop.f32.mrb[0].mxu0
    %v287 = vadd.f32 %v202, %v286
    %v288 = vpop.f32.mrb[0].mxu0
    %v289 = vpop.f32.mrb[0].mxu0
    %v290 = vadd.f32 %v202, %v289
    %v291 = vpop.f32.mrb[0].mxu0
    %292 = vdwg.mxu0
    %293 = vst [vmem:[#allocation8] sm:$0xff] %v287
    %294 = vst [vmem:[#allocation8 + $0x8] sm:$0xff] %v290
    // Predicated region
    $region34: #{tpu_custom_call.1} parent=1 // pred_check
      _
    $region35: #{tpu_custom_call.1} parent=1 // pred_check_branch
      %296 = sbr.rel (0) target = $region37
    $region36: #{tpu_custom_call.1} parent=1 // pred_region
      %s298 = ssub.s32 256, 256
      %299 = vsyncadd [#allocation4], %s298
      %s300 = sshll.u32 [#allocation8], 4
      %s301 = int_to_ptr.vmem [resolvable:$true] %s300
      %306 = dma.vmem_to_hbm [thread:$0]  %s301, 256, %s5, [#allocation4], 128, 128, 8
    $region37: #{tpu_custom_call.1} parent=1 // pred_fallthru
      _
    // Predicated region
    $region38: #{tpu_custom_call.1} parent=1 // pred_check
      _
    $region39: #{tpu_custom_call.1} parent=1 // pred_check_branch
      %308 = sbr.rel (0) target = $region41
    $region40: #{tpu_custom_call.1} parent=1 // pred_region
      %309 = dma.done [#allocation4], 256
    $region41: #{tpu_custom_call.1} parent=1 // pred_fallthru
      _
    %310 = vsyncpa [#allocation3], 1
    %311 = vsyncpa [#allocation6], 1
    %312 = vsyncpa [#allocation4], 1

</llo_original>
